<compile_context>
chip_gen: v6e
topology: v6e:2x2x1
jax: 0.10.0
libtpu: 0.0.40
codegen_flags: <defaults>
</compile_context>

<pallas_src>
import functools
import math

import jax
import jax.numpy as jnp
from jax import lax
from jax.experimental import pallas as pl
from jax.experimental.pallas import tpu as pltpu

# Deterministic stand-in for get_subconfig('losses')['rem_kl_lambda'].
REM_KL_LAMBDA = 0.01


def _rem_kl_uniform_kernel(logits_ref, out_ref, *, inv_n, log_inv_n,
                           batch_size, tile_b, need_mask):
    """Partial sum of uniform * (log(uniform) - log(clamp(softmax(x)))) for one tile."""
    x = logits_ref[...].astype(jnp.float32)            # (tile_b, C)

    # Row-wise softmax over the class (lane) axis.
    m = jnp.max(x, axis=1, keepdims=True)
    e = jnp.exp(x - m)                                  # EUP
    s = jnp.sum(e, axis=1, keepdims=True)               # XLU cross-lane reduce
    probs = e * (1.0 / s)                               # one divide per row, then VPU mul
    probs = jnp.maximum(probs, 1e-8)                    # torch.clamp(probs, min=1e-8)
    logp = jnp.log(probs)

    # F.kl_div pointwise term with a uniform target: u * (log u - log p).
    term = inv_n * (log_inv_n - logp)                   # (tile_b, C)

    if need_mask:
        # Last tile may extend past the true batch; zero padded rows.
        row = lax.broadcasted_iota(jnp.int32, term.shape, 0) + pl.program_id(0) * tile_b
        term = jnp.where(row < batch_size, term, 0.0)

    out_ref[...] = jnp.sum(term, keepdims=True)         # (1, 1) partial sum


def remover_kl_uniform_loss(logits, number_of_targets, lambda_adv=REM_KL_LAMBDA):
    """Pallas implementation of Remover_KL_Uniform_Loss.forward.

    Args:
      logits:            [B, C] float array.
      number_of_targets: static Python int (defines the uniform target 1/N).
      lambda_adv:        loss weight.
    Returns:
      scalar float32 loss.
    """
    B, C = logits.shape
    inv_n = 1.0 / float(number_of_targets)

    # Tile the batch: biggest tile (multiple of 8) whose double-buffered input
    # stays under ~8 MiB of VMEM -> safe on v7x (32 MiB scoped default), lots
    # of headroom on v5e/v6e.
    bytes_per_row = C * 4
    max_tile_b = max(8, ((8 << 20) // (2 * bytes_per_row)) // 8 * 8)
    tile_b = B if B <= max_tile_b else max_tile_b
    num_tiles = pl.cdiv(B, tile_b)
    need_mask = (B % tile_b) != 0

    kernel = functools.partial(
        _rem_kl_uniform_kernel,
        inv_n=inv_n,
        log_inv_n=math.log(inv_n),
        batch_size=B,
        tile_b=tile_b,
        need_mask=need_mask,
    )

    partials = pl.pallas_call(
        kernel,
        out_shape=jax.ShapeDtypeStruct((num_tiles, 1), jnp.float32),
        grid=(num_tiles,),
        in_specs=[pl.BlockSpec((tile_b, C), lambda i: (i, 0))],
        out_specs=pl.BlockSpec((1, 1), lambda i: (i, 0)),
        compiler_params=pltpu.CompilerParams(
            dimension_semantics=("parallel",),
        ),
    )(logits)

    # 'batchmean' reduction and the adversarial weight (trivial scalar XLA work).
    return jnp.sum(partials) * (lambda_adv / B)


def _reference(logits, number_of_targets, lambda_adv):
    probs = jax.nn.softmax(logits.astype(jnp.float32), axis=1)
    probs = jnp.maximum(probs, 1e-8)
    uniform = jnp.full_like(probs, 1.0 / number_of_targets)
    kl = uniform * (jnp.log(uniform) - jnp.log(probs))
    return jnp.sum(kl) / logits.shape[0] * lambda_adv


if __name__ == "__main__":
    key = jax.random.PRNGKey(0)
    B, C = 8, 16
    number_of_targets = C

    logits = jax.random.normal(key, (B, C), dtype=jnp.float32)

    out = remover_kl_uniform_loss(logits, number_of_targets)
    out = jax.block_until_ready(out)

    ref = _reference(logits, number_of_targets, REM_KL_LAMBDA)
    assert out.shape == ()
    assert jnp.allclose(out, ref, rtol=1e-5, atol=1e-6), (out, ref)

    print("KERNEL_OK")
</pallas_src>

<mosaic_0001>
module attributes {stable_mosaic.version = 11 : i64} {
  func.func @_rem_kl_uniform_kernel(%arg0: i32, %arg1: memref<8x16xf32, #tpu.memory_space<vmem>>, %arg2: memref<1x1xf32, #tpu.memory_space<vmem>>) attributes {dimension_semantics = [#tpu.dimension_semantics<parallel>], iteration_bounds = array<i64: 1>, scalar_prefetch = 0 : i64, scratch_operands = 0 : i64, tpu.core_type = #tpu.core_type<tc>, window_params = [{transform_indices = @transform_0, window_bounds = array<i64: 8, 16>}, {transform_indices = @transform_1, window_bounds = array<i64: 1, 1>}]} {
    %c0 = arith.constant 0 : index
    %c0_0 = arith.constant 0 : index
    %0 = vector.load %arg1[%c0, %c0_0] : memref<8x16xf32, #tpu.memory_space<vmem>>, vector<8x16xf32>
    %cst = arith.constant dense<0xFF800000> : vector<8xf32>
    %1 = vector.multi_reduction <maximumf>, %0, %cst [1] : vector<8x16xf32> to vector<8xf32>
    %2 = vector.shape_cast %1 : vector<8xf32> to vector<8x1xf32>
    %3 = vector.broadcast %2 : vector<8x1xf32> to vector<8x16xf32>
    %4 = arith.subf %0, %3 : vector<8x16xf32>
    %5 = math.exp %4 : vector<8x16xf32>
    %cst_1 = arith.constant dense<0.000000e+00> : vector<8xf32>
    %6 = vector.multi_reduction <add>, %5, %cst_1 [1] : vector<8x16xf32> to vector<8xf32>
    %7 = vector.shape_cast %6 : vector<8xf32> to vector<8x1xf32>
    %cst_2 = arith.constant 1.000000e+00 : f32
    %8 = vector.broadcast %cst_2 : f32 to vector<8x1xf32>
    %9 = arith.divf %8, %7 : vector<8x1xf32>
    %10 = vector.broadcast %9 : vector<8x1xf32> to vector<8x16xf32>
    %11 = arith.mulf %5, %10 : vector<8x16xf32>
    %cst_3 = arith.constant 9.99999993E-9 : f32
    %12 = vector.broadcast %cst_3 : f32 to vector<8x16xf32>
    %13 = arith.maximumf %11, %12 : vector<8x16xf32>
    %14 = math.log %13 : vector<8x16xf32>
    %cst_4 = arith.constant -2.77258873 : f32
    %15 = vector.broadcast %cst_4 : f32 to vector<8x16xf32>
    %16 = arith.subf %15, %14 : vector<8x16xf32>
    %cst_5 = arith.constant 6.250000e-02 : f32
    %17 = vector.broadcast %cst_5 : f32 to vector<8x16xf32>
    %18 = arith.mulf %17, %16 : vector<8x16xf32>
    %19 = vector.shape_cast %18 : vector<8x16xf32> to vector<1x8x16xf32>
    %cst_6 = arith.constant dense<0.000000e+00> : vector<1xf32>
    %20 = vector.multi_reduction <add>, %19, %cst_6 [1, 2] : vector<1x8x16xf32> to vector<1xf32>
    %21 = vector.shape_cast %20 : vector<1xf32> to vector<1x1x1xf32>
    %22 = vector.extract %21[0, 0, 0] : f32 from vector<1x1x1xf32>
    %23 = vector.broadcast %22 : f32 to vector<1x1xf32>
    %c0_7 = arith.constant 0 : index
    %c0_8 = arith.constant 0 : index
    %24 = vector.load %arg2[%c0_7, %c0_8] : memref<1x1xf32, #tpu.memory_space<vmem>>, vector<1x1xf32>
    tpu.vector_store %arg2[%c0_7, %c0_8], %23 {strides = array<i32>} : memref<1x1xf32, #tpu.memory_space<vmem>>, vector<1x1xf32>,
    return
  }
  func.func @transform_0(%arg0: i32) -> (i32, i32) {
    %c0_i32 = arith.constant 0 : i32
    %c0_i32_0 = arith.constant 0 : i32
    return %arg0, %c0_i32 : i32, i32
  }
  func.func @transform_1(%arg0: i32) -> (i32, i32) {
    %c0_i32 = arith.constant 0 : i32
    %c0_i32_0 = arith.constant 0 : i32
    return %arg0, %c0_i32 : i32, i32
  }
}

</mosaic_0001>

<llo_original>
// kernel: tpu_custom_call.1
$region0: #{tpu_custom_call.1}
  #allocation0 [shape = 'u32[]', space=smem, size = 0x4, offset = 0x4, fixed_abs, tag = 'smem constant byte address 0x4 - core index']
  #allocation1 [shape = 'u32[144,128]{1,0:T(1,128)}', space=vmem, size = 0x12000, scoped, tag = 'internal scratch']
  %s0 = inlined_call_operand.hbm [shape: f32[8,16], index: 0, kind: input, shape index: {}]
  %s1 = inlined_call_operand.hbm [shape: f32[1,1], index: 1, kind: output, shape index: {}]
  %s2 = sld [smem:[#allocation0]]
  $region18: #{tpu_custom_call.1} parent=0
    _
  %s4 = ssub.s32 1, %s2
  %s5 = scalar_select 0, %s4, %s2
  $region1: #{tpu_custom_call.1} parent=0
    #allocation2 [shape = 'u8[4096]{0}', space=vmem, size = 0x1000, scoped, tag = 'input window, operand 0, single buffered']
    #allocation3 [shape = 's32[1]{0}', space=sflag, size = 0x4, scoped, tag = 'scoped memory for tpu_custom_call.1']
    #allocation4 [shape = 's32[1]{0}', space=sflag, size = 0x4, scoped, tag = 'scoped memory for tpu_custom_call.1']
    #allocation5 [shape = 'u8[512]{0}', space=vmem, size = 0x400, scoped, tag = 'output window, operand 0, single buffered']
    %6 = vsyncpa [#allocation3], 0
    %7 = vsyncpa [#allocation4], 0
    // Predicated region
    $region2: #{tpu_custom_call.1} parent=1 // pred_check
      _
    $region3: #{tpu_custom_call.1} parent=1 // pred_check_branch
      %9 = sbr.rel (0) target = $region5
    $region4: #{tpu_custom_call.1} parent=1 // pred_region
      %s11 = ssub.s32 128, 128
      %12 = vsyncadd [#allocation3], %s11
      %s14 = sshll.u32 [#allocation2], 4
      %s15 = int_to_ptr.vmem [resolvable:$true] %s14
      %17 = dma.hbm_to_vmem [thread:$0]  %s0, 128, %s15, [#allocation3]
    $region5: #{tpu_custom_call.1} parent=1 // pred_fallthru
      _
    // Predicated region
    $region6: #{tpu_custom_call.1} parent=1 // pred_check
      _
    $region7: #{tpu_custom_call.1} parent=1 // pred_check_branch
      %19 = sbr.rel (0) target = $region9
    $region8: #{tpu_custom_call.1} parent=1 // pred_region
      %20 = dma.done [#allocation3], 128
    $region9: #{tpu_custom_call.1} parent=1 // pred_fallthru
      _
    %v21 = vld [vmem:[#allocation2] sm:$0xff]
    %vm22 = vcmask 130048
    %v23 = vsel %vm22, %v21, -inf
    %24 = vmax.xlane.f32.xlu0 %v23
    %v25 = vpop.xlane.xlu0 %24
    %v26 = vsub.f32 %v21, %v25
    %v27 = vmul.f32 %v26, 1.442695
    %v28 = vpow.pop %v27
    %v29 = vsel %vm22, %v28, 0.0
    %30 = vadd.xlane.f32.xlu0 %v29
    %v31 = vpop.xlane.xlu0 %30
    %v32 = vrcp.pop %v31
    %v33 = vmul.f32 1.0, %v32
    %v34 = vmul.f32 %v28, %v33
    %v35 = vmax.f32 %v34, 1e-08
    %v36 = vlog2.pop %v35
    %v37 = vmul.f32 %v36, 0.6931472
    %v38 = vsub.f32 -2.7725887, %v37
    %v39 = vmul.f32 %v38, 0.0625
    %v40 = vsel %vm22, %v39, 0.0
    %41 = vadd.xlane.f32.xlu0 %v40
    %v42 = vpop.xlane.xlu0 %41
    %v43 = vrot.slane %v42, 4
    %v44 = vadd.f32 %v42, %v43
    %v45 = vrot.slane %v44, 2
    %v46 = vadd.f32 %v44, %v45
    %v47 = vrot.slane %v46, 1
    %v48 = vadd.f32 %v46, %v47
    %s49 = vtos %v48
    %v50 = vstv %s49
    %vm51 = vcmask 0
    %52 = vst.msk [vmem:[#allocation5] sm:$0x1] %vm51, %v50
    // Predicated region
    $region10: #{tpu_custom_call.1} parent=1 // pred_check
      _
    $region11: #{tpu_custom_call.1} parent=1 // pred_check_branch
      %54 = sbr.rel (0) target = $region13
    $region12: #{tpu_custom_call.1} parent=1 // pred_region
      %s56 = ssub.s32 16, 16
      %57 = vsyncadd [#allocation4], %s56
      %s59 = sshll.u32 [#allocation5], 4
      %s60 = int_to_ptr.vmem [resolvable:$true] %s59
      %62 = dma.vmem_to_hbm [thread:$0]  %s60, 16, %s1, [#allocation4]
    $region13: #{tpu_custom_call.1} parent=1 // pred_fallthru
      _
    // Predicated region
    $region14: #{tpu_custom_call.1} parent=1 // pred_check
      _
    $region15: #{tpu_custom_call.1} parent=1 // pred_check_branch
      %64 = sbr.rel (0) target = $region17
    $region16: #{tpu_custom_call.1} parent=1 // pred_region
      %65 = dma.done [#allocation4], 16
    $region17: #{tpu_custom_call.1} parent=1 // pred_fallthru
      _
    %66 = vsyncpa [#allocation3], 1
    %67 = vsyncpa [#allocation4], 1

</llo_original>
